<compile_context>
chip_gen: v7x
topology: tpu7x:2x2x1
jax: 0.10.0
libtpu: 0.0.40
codegen_flags: <defaults>
</compile_context>

<pallas_src>
import functools

import jax
import jax.numpy as jnp
from jax.experimental import pallas as pl
from jax.experimental.pallas import tpu as pltpu

_LANE = 128
_TARGET_BLOCK_BYTES = 8 << 20   # ~8 MiB per block, dtype-independent
_MULTI_STEP_BYTES = 2 << 20     # force a multi-step grid above this total size
_ROW_ALIGN = 32                 # satisfies (8,128)/(16,128)/(32,128) sublane tiling


def _round_up(x, m):
    return ((x + m - 1) // m) * m


def _prefers_f32_compute():
    """True on chips without bf16 VPU/EUP (v5e and older) -> upcast to f32."""
    try:
        kind = jax.devices()[0].device_kind.lower()
    except Exception:
        return True
    return any(tag in kind for tag in ("v2", "v3", "v4", "v5"))


def _swish_kernel(x_ref, o_ref, *, compute_dtype):
    x = x_ref[...].astype(compute_dtype)
    half = jnp.asarray(0.5, dtype=compute_dtype)
    # sigmoid(x) = 0.5 * tanh(0.5 * x) + 0.5  -> one EUP transcendental per
    # element (avoids exp + full divide, which can overtake the HBM roofline
    # on v7x for narrow dtypes).
    sig = half * jnp.tanh(half * x) + half
    o_ref[...] = (x * sig).astype(o_ref.dtype)


def swish(x):
    """Swish / SiLU activation: sigmoid(x) * x, elementwise, any shape."""
    orig_shape = x.shape
    orig_dtype = x.dtype
    n = x.size
    if n == 0:
        return x

    itemsize = jnp.dtype(orig_dtype).itemsize

    # Compute dtype: native bf16 on chips with bf16 VPU/EUP (v6e/v7x), f32
    # upcast otherwise (v5e) and for all other input dtypes.
    if orig_dtype == jnp.bfloat16 and not _prefers_f32_compute():
        compute_dtype = jnp.bfloat16
    else:
        compute_dtype = jnp.float32

    # Fast path (common for post-conv NCHW activations): flat size divisible
    # by the 128-lane width -> contiguous reshape only (bitcast, no HBM copy).
    pad = (-n) % _LANE
    if pad == 0:
        x2d = x.reshape(n // _LANE, _LANE)
    else:
        # Rare ragged case: zero-pad the sub-lane remainder (swish(0) == 0, so
        # the padded tail is benign) and slice it off afterwards.
        # TODO(synk): mask the tail store instead to avoid the extra HBM pass.
        x2d = jnp.pad(jnp.ravel(x), (0, pad)).reshape(-1, _LANE)
    rows = x2d.shape[0]

    # Byte-targeted tile: ~8 MiB blocks regardless of dtype (f32: 16384 rows,
    # bf16: 32768, int8: 65536), rows a multiple of 32 so all sublane tiling
    # constraints hold for partial blocks.
    max_tile_rows = max(
        _ROW_ALIGN,
        (_TARGET_BLOCK_BYTES // (_LANE * itemsize)) // _ROW_ALIGN * _ROW_ALIGN,
    )
    block_rows = min(rows, max_tile_rows)

    total_bytes = rows * _LANE * itemsize
    if total_bytes >= _MULTI_STEP_BYTES:
        # Force >= 4 grid steps: even step count balances both v7x TensorCores
        # on the "parallel" axis; >= 3 steps lets the BlockSpec pipeline hide
        # prefetch of block i+1 and writeback of block i-1 under compute of i.
        quarter = _round_up(pl.cdiv(rows, 4), _ROW_ALIGN)
        block_rows = min(block_rows, quarter)

    grid = (pl.cdiv(rows, block_rows),)

    # VMEM budget: 2x double-buffered input + 2x output blocks + headroom for
    # Mosaic internal scratch, capped well under v7x's 64 MiB physical VMEM.
    block_bytes = block_rows * _LANE * itemsize
    vmem_limit = int(min(48 << 20, max(16 << 20, 4 * block_bytes + (8 << 20))))

    out2d = pl.pallas_call(
        functools.partial(_swish_kernel, compute_dtype=compute_dtype),
        out_shape=jax.ShapeDtypeStruct((rows, _LANE), orig_dtype),
        grid_spec=pltpu.PrefetchScalarGridSpec(
            num_scalar_prefetch=0,
            grid=grid,
            in_specs=[pl.BlockSpec((block_rows, _LANE), lambda i: (i, 0))],
            out_specs=pl.BlockSpec((block_rows, _LANE), lambda i: (i, 0)),
        ),
        compiler_params=pltpu.CompilerParams(
            # Megacore-shard the row axis across both TensorCores on v7x;
            # no-op on single-TC v5e/v6e.
            dimension_semantics=("parallel",),
            vmem_limit_bytes=vmem_limit,
        ),
    )(x2d)

    if pad == 0:
        return out2d.reshape(orig_shape)
    return out2d.reshape(-1)[:n].reshape(orig_shape)


if __name__ == "__main__":
    key = jax.random.PRNGKey(0)
    k1, k2, k3, k4 = jax.random.split(key, 4)

    # Small NCHW-shaped input consistent with how Swish is used (post-conv).
    x = jax.random.normal(k1, (2, 4, 16, 16), dtype=jnp.float32)
    out = jax.block_until_ready(swish(x))
    ref = jax.nn.sigmoid(x) * x
    assert out.shape == x.shape and out.dtype == x.dtype
    assert jnp.max(jnp.abs(out - ref)) < 1e-5

    # Ragged fallback path (size not divisible by 128).
    x2 = jax.random.normal(k2, (3, 5, 7), dtype=jnp.float32)
    out2 = jax.block_until_ready(swish(x2))
    ref2 = jax.nn.sigmoid(x2) * x2
    assert out2.shape == x2.shape and out2.dtype == x2.dtype
    assert jnp.max(jnp.abs(out2 - ref2)) < 1e-5

    # Multi-step grid path (>= 2 MiB total -> 4 pipelined / sharded steps).
    x3 = jax.random.normal(k3, (1024, 1024), dtype=jnp.float32)
    out3 = jax.block_until_ready(swish(x3))
    ref3 = jax.nn.sigmoid(x3) * x3
    assert out3.shape == x3.shape and out3.dtype == x3.dtype
    assert jnp.max(jnp.abs(out3 - ref3)) < 1e-5

    # bf16 path (native bf16 compute on v6e/v7x, f32 upcast on v5e).
    x4 = jax.random.normal(k4, (4, 8, 32), dtype=jnp.bfloat16)
    out4 = jax.block_until_ready(swish(x4))
    x4f = x4.astype(jnp.float32)
    ref4 = jax.nn.sigmoid(x4f) * x4f
    assert out4.shape == x4.shape and out4.dtype == x4.dtype
    assert jnp.max(jnp.abs(out4.astype(jnp.float32) - ref4)) < 0.1

    print("KERNEL_OK")
</pallas_src>

<mosaic_0001>
module attributes {stable_mosaic.version = 11 : i64} {
  func.func @_swish_kernel(%arg0: i32, %arg1: memref<16x128xf32, #tpu.memory_space<vmem>>, %arg2: memref<16x128xf32, #tpu.memory_space<vmem>>) attributes {dimension_semantics = [#tpu.dimension_semantics<parallel>], iteration_bounds = array<i64: 1>, scalar_prefetch = 0 : i64, scratch_operands = 0 : i64, tpu.core_type = #tpu.core_type<tc>, window_params = [{transform_indices = @transform_0, window_bounds = array<i64: 16, 128>}, {transform_indices = @transform_1, window_bounds = array<i64: 16, 128>}]} {
    %c0 = arith.constant 0 : index
    %c0_0 = arith.constant 0 : index
    %0 = vector.load %arg1[%c0, %c0_0] : memref<16x128xf32, #tpu.memory_space<vmem>>, vector<16x128xf32>
    %cst = arith.constant 5.000000e-01 : f32
    %1 = vector.broadcast %cst : f32 to vector<16x128xf32>
    %2 = arith.mulf %1, %0 : vector<16x128xf32>
    %3 = math.tanh %2 : vector<16x128xf32>
    %cst_1 = arith.constant 5.000000e-01 : f32
    %4 = vector.broadcast %cst_1 : f32 to vector<16x128xf32>
    %5 = arith.mulf %4, %3 : vector<16x128xf32>
    %cst_2 = arith.constant 5.000000e-01 : f32
    %6 = vector.broadcast %cst_2 : f32 to vector<16x128xf32>
    %7 = arith.addf %5, %6 : vector<16x128xf32>
    %8 = arith.mulf %0, %7 : vector<16x128xf32>
    %c0_3 = arith.constant 0 : index
    %c0_4 = arith.constant 0 : index
    %9 = vector.load %arg2[%c0_3, %c0_4] : memref<16x128xf32, #tpu.memory_space<vmem>>, vector<16x128xf32>
    tpu.vector_store %arg2[%c0_3, %c0_4], %8 {strides = array<i32>} : memref<16x128xf32, #tpu.memory_space<vmem>>, vector<16x128xf32>,
    return
  }
  func.func @transform_0(%arg0: i32) -> (i32, i32) {
    %c0_i32 = arith.constant 0 : i32
    %c0_i32_0 = arith.constant 0 : i32
    return %arg0, %c0_i32 : i32, i32
  }
  func.func @transform_1(%arg0: i32) -> (i32, i32) {
    %c0_i32 = arith.constant 0 : i32
    %c0_i32_0 = arith.constant 0 : i32
    return %arg0, %c0_i32 : i32, i32
  }
}

</mosaic_0001>

<llo_original>
// kernel: tpu_custom_call.1
$region0: #{tpu_custom_call.1}
  #allocation0 [shape = 'u32[]', space=smem, size = 0x4, offset = 0x4, fixed_abs, tag = 'smem constant byte address 0x4 - core index']
  #allocation1 [shape = 'u32[144,128]{1,0:T(1,128)}', space=vmem, size = 0x12000, scoped, tag = 'internal scratch']
  %s0 = inlined_call_operand.hbm [shape: f32[16,128], index: 0, kind: input, shape index: {}]
  %s1 = inlined_call_operand.hbm [shape: f32[16,128], index: 1, kind: output, shape index: {}]
  %s2 = sld [smem:[#allocation0]]
  $region18: #{tpu_custom_call.1} parent=0
    _
  %s4 = ssub.s32 1, %s2
  %s5 = scalar_select 0, %s4, %s2
  $region1: #{tpu_custom_call.1} parent=0
    #allocation2 [shape = 'u8[8192]{0}', space=vmem, size = 0x2000, scoped, tag = 'input window, operand 0, single buffered']
    #allocation3 [shape = 's32[1]{0}', space=sflag, size = 0x4, scoped, tag = 'scoped memory for tpu_custom_call.1']
    #allocation4 [shape = 's32[1]{0}', space=sflag, size = 0x4, scoped, tag = 'scoped memory for tpu_custom_call.1']
    #allocation5 [shape = 'u8[8192]{0}', space=vmem, size = 0x2000, scoped, tag = 'output window, operand 0, single buffered']
    %6 = vsyncpa [#allocation3], 0
    %7 = vsyncpa [#allocation4], 0
    // Predicated region
    $region2: #{tpu_custom_call.1} parent=1 // pred_check
      _
    $region3: #{tpu_custom_call.1} parent=1 // pred_check_branch
      %9 = sbr.rel (0) target = $region5
    $region4: #{tpu_custom_call.1} parent=1 // pred_region
      %s11 = ssub.s32 256, 256
      %12 = vsyncadd [#allocation3], %s11
      %s13 = sshll.u32 [#allocation2], 4
      %s14 = int_to_ptr.vmem [resolvable:$true] %s13
      %19 = dma.hbm_to_vmem [thread:$0]  %s0, 256, %s14, [#allocation3], 128, 128, 8
    $region5: #{tpu_custom_call.1} parent=1 // pred_fallthru
      _
    // Predicated region
    $region6: #{tpu_custom_call.1} parent=1 // pred_check
      _
    $region7: #{tpu_custom_call.1} parent=1 // pred_check_branch
      %21 = sbr.rel (0) target = $region9
    $region8: #{tpu_custom_call.1} parent=1 // pred_region
      %22 = dma.done [#allocation3], 256
    $region9: #{tpu_custom_call.1} parent=1 // pred_fallthru
      _
    %v23 = vld [vmem:[#allocation2] sm:$0xff]
    %v24 = vld [vmem:[#allocation2 + $0x8] sm:$0xff]
    %v25 = vmul.f32 %v23, 0.5
    %v26 = vmul.f32 %v24, 0.5
    %v27 = vtanh.pop %v25
    %v28 = vtanh.pop %v26
    %v29 = vmul.f32 %v27, 0.5
    %v30 = vmul.f32 %v28, 0.5
    %v31 = vadd.f32 %v29, 0.5
    %v32 = vadd.f32 %v30, 0.5
    %v33 = vmul.f32 %v23, %v31
    %v34 = vmul.f32 %v24, %v32
    %35 = vst [vmem:[#allocation5] sm:$0xff] %v33
    %36 = vst [vmem:[#allocation5 + $0x8] sm:$0xff] %v34
    // Predicated region
    $region10: #{tpu_custom_call.1} parent=1 // pred_check
      _
    $region11: #{tpu_custom_call.1} parent=1 // pred_check_branch
      %38 = sbr.rel (0) target = $region13
    $region12: #{tpu_custom_call.1} parent=1 // pred_region
      %s40 = ssub.s32 256, 256
      %41 = vsyncadd [#allocation4], %s40
      %s42 = sshll.u32 [#allocation5], 4
      %s43 = int_to_ptr.vmem [resolvable:$true] %s42
      %48 = dma.vmem_to_hbm [thread:$0]  %s43, 256, %s1, [#allocation4], 128, 128, 8
    $region13: #{tpu_custom_call.1} parent=1 // pred_fallthru
      _
    // Predicated region
    $region14: #{tpu_custom_call.1} parent=1 // pred_check
      _
    $region15: #{tpu_custom_call.1} parent=1 // pred_check_branch
      %50 = sbr.rel (0) target = $region17
    $region16: #{tpu_custom_call.1} parent=1 // pred_region
      %51 = dma.done [#allocation4], 256
    $region17: #{tpu_custom_call.1} parent=1 // pred_fallthru
      _
    %52 = vsyncpa [#allocation3], 1
    %53 = vsyncpa [#allocation4], 1

</llo_original>
